<compile_context>
chip_gen: v6e
topology: v6e:2x2x1
jax: 0.10.0
libtpu: 0.0.40
codegen_flags: <defaults>
</compile_context>

<pallas_src>
import functools

import jax
import jax.numpy as jnp
from jax.experimental import pallas as pl
from jax.experimental.pallas import tpu as pltpu

NEG_BIG = -9e15  # same replacement-mask constant as the PyTorch reference


def _elu(v):
    return jnp.where(v > 0, v, jnp.expm1(jnp.minimum(v, 0.0)))


def _vmem_limit_bytes():
    """Generation-aware VMEM budget: physical capacity minus ~25% headroom."""
    try:
        cap = pltpu.get_tpu_info().vmem_capacity_bytes
    except Exception:
        cap = 64 * 1024 * 1024
    return int(cap * 3 // 4)


def _row_tile(n):
    """Query-row tile: multiple of 32 (int8 adjacency sublanes) dividing N,
    leaving >= 2 grid steps; falls back to full N for tiny graphs."""
    for t in (512, 256, 128, 64, 32):
        if t < n and n % t == 0:
            return t
    return n


def _key_tile(n):
    """Key tile: multiple of 128 (lane width / int8 lane tiling) dividing N,
    else the full key dimension."""
    for t in (512, 256, 128):
        if t < n and n % t == 0:
            return t
    return n


# --------------------------------------------------------------------------
# Kernel A: fused projection.  One wide matmul produces both the per-head
# projected features AND the per-head attention scores (the wrapper folded
# W_h @ a_h into extra columns), per query-row tile.
# --------------------------------------------------------------------------
def _proj_kernel(x_ref, w_ref, out_ref):
    out_ref[...] = jnp.dot(x_ref[...], w_ref[...],
                           preferred_element_type=jnp.float32)


def _proj_call(x, w_cat, tq, vmem_limit):
    n, f_in = x.shape
    f_out = w_cat.shape[1]
    nq = n // tq
    return pl.pallas_call(
        _proj_kernel,
        out_shape=jax.ShapeDtypeStruct((n, f_out), jnp.float32),
        grid=(nq,),
        in_specs=[
            pl.BlockSpec((tq, f_in), lambda i: (i, 0)),
            # grid-invariant weights: single-buffered
            pl.BlockSpec((f_in, f_out), lambda i: (0, 0),
                         pipeline_mode=pl.Buffered(1)),
        ],
        out_specs=pl.BlockSpec((tq, f_out), lambda i: (i, 0)),
        compiler_params=pltpu.CompilerParams(
            dimension_semantics=("parallel",),
            vmem_limit_bytes=vmem_limit),
    )(x, w_cat)


# --------------------------------------------------------------------------
# Kernel B: layer-1 multi-head attention, key-tiled online softmax.
# grid = (rows "parallel", keys "arbitrary").  int8 adjacency compared once
# per tile; per-head accumulator slices written in place; deferred
# normalization + ELU + concatenated-layout write at the last key step.
# --------------------------------------------------------------------------
def _attn_heads_kernel(s1_ref, s2_ref, adj_ref, wh_ref, out_ref,
                       m_sc, l_sc, acc_sc, *, alpha, num_heads, f_hid):
    k = pl.program_id(1)

    @pl.when(k == 0)
    def _():
        m_sc[...] = jnp.full_like(m_sc, -jnp.inf)
        l_sc[...] = jnp.zeros_like(l_sc)
        acc_sc[...] = jnp.zeros_like(acc_sc)

    adj_ok = adj_ref[...] > 0                               # (Tq,Tk), once per tile

    for h in range(num_heads):                              # static unroll (H small)
        c0, c1 = h * f_hid, (h + 1) * f_hid
        z = s1_ref[:, h:h + 1] + s2_ref[h:h + 1, :]         # (Tq,1)+(1,Tk)->(Tq,Tk)
        z = jnp.where(z > 0, z, alpha * z)                  # LeakyReLU (pre-mask)
        e = jnp.where(adj_ok, z, NEG_BIG)                   # replacement mask (== ref)
        m_prev = m_sc[:, h:h + 1]
        m_new = jnp.maximum(m_prev, jnp.max(e, axis=1, keepdims=True))
        corr = jnp.exp(m_prev - m_new)                      # rescale old running sums
        p = jnp.exp(e - m_new)                              # (Tq, Tk)
        l_sc[:, h:h + 1] = corr * l_sc[:, h:h + 1] + jnp.sum(p, axis=1, keepdims=True)
        acc_sc[:, c0:c1] = corr * acc_sc[:, c0:c1] + jnp.dot(
            p, wh_ref[:, c0:c1], preferred_element_type=jnp.float32)
        m_sc[:, h:h + 1] = m_new

    @pl.when(k == pl.num_programs(1) - 1)
    def _():
        for h in range(num_heads):
            c0, c1 = h * f_hid, (h + 1) * f_hid
            out_ref[:, c0:c1] = _elu(acc_sc[:, c0:c1] / l_sc[:, h:h + 1])


def _attn_heads_call(s1, s2t, adj_i8, wh_all, *, alpha, f_hid, tq, tk, vmem_limit):
    n, hf = wh_all.shape
    nheads = s1.shape[1]
    nq, nk = n // tq, n // tk
    kern = functools.partial(_attn_heads_kernel, alpha=alpha,
                             num_heads=nheads, f_hid=f_hid)
    return pl.pallas_call(
        kern,
        out_shape=jax.ShapeDtypeStruct((n, hf), jnp.float32),
        grid=(nq, nk),
        in_specs=[
            pl.BlockSpec((tq, nheads), lambda i, k: (i, 0)),   # query-side scores
            pl.BlockSpec((nheads, tk), lambda i, k: (0, k)),   # key-side scores
            pl.BlockSpec((tq, tk), lambda i, k: (i, k)),       # int8 adjacency tile
            pl.BlockSpec((tk, hf), lambda i, k: (k, 0)),       # key-side features
        ],
        out_specs=pl.BlockSpec((tq, hf), lambda i, k: (i, 0)),
        scratch_shapes=[
            pltpu.VMEM((tq, nheads), jnp.float32),   # running max
            pltpu.VMEM((tq, nheads), jnp.float32),   # running denominator
            pltpu.VMEM((tq, hf), jnp.float32),       # un-normalized accumulator
        ],
        compiler_params=pltpu.CompilerParams(
            dimension_semantics=("parallel", "arbitrary"),
            vmem_limit_bytes=vmem_limit),
        cost_estimate=pl.CostEstimate(
            flops=int(2 * nheads * n * n * f_hid + 10 * nheads * n * n),
            transcendentals=int(nheads * n * n),
            bytes_accessed=int(n * n + 4 * (2 * n * hf + 2 * n * nheads))),
    )(s1, s2t, adj_i8, wh_all)


# --------------------------------------------------------------------------
# Kernel C: output attention layer (concat=False), key-tiled online softmax,
# fused F.elu + log_softmax at the last key step.
# --------------------------------------------------------------------------
def _attn_out_kernel(s1_ref, s2_ref, adj_ref, wh_ref, out_ref,
                     m_sc, l_sc, acc_sc, *, alpha):
    k = pl.program_id(1)

    @pl.when(k == 0)
    def _():
        m_sc[...] = jnp.full_like(m_sc, -jnp.inf)
        l_sc[...] = jnp.zeros_like(l_sc)
        acc_sc[...] = jnp.zeros_like(acc_sc)

    z = s1_ref[...] + s2_ref[...]                           # (Tq,1)+(1,Tk)->(Tq,Tk)
    z = jnp.where(z > 0, z, alpha * z)                      # LeakyReLU
    e = jnp.where(adj_ref[...] > 0, z, NEG_BIG)             # in-kernel mask (int8 adj)
    m_prev = m_sc[...]
    m_new = jnp.maximum(m_prev, jnp.max(e, axis=1, keepdims=True))
    corr = jnp.exp(m_prev - m_new)
    p = jnp.exp(e - m_new)
    l_sc[...] = corr * l_sc[...] + jnp.sum(p, axis=1, keepdims=True)
    acc_sc[...] = corr * acc_sc[...] + jnp.dot(
        p, wh_ref[...], preferred_element_type=jnp.float32)
    m_sc[...] = m_new

    @pl.when(k == pl.num_programs(1) - 1)
    def _():
        hagg = _elu(acc_sc[...] / l_sc[...])                # F.elu in GAT.forward
        mm = jnp.max(hagg, axis=1, keepdims=True)           # log_softmax over classes
        zz = hagg - mm
        out_ref[...] = zz - jnp.log(jnp.sum(jnp.exp(zz), axis=1, keepdims=True))


def _attn_out_call(s1o, s2o, adj_i8, wh2, *, alpha, tq, tk, vmem_limit):
    n, c = wh2.shape
    nq, nk = n // tq, n // tk
    kern = functools.partial(_attn_out_kernel, alpha=alpha)
    return pl.pallas_call(
        kern,
        out_shape=jax.ShapeDtypeStruct((n, c), jnp.float32),
        grid=(nq, nk),
        in_specs=[
            pl.BlockSpec((tq, 1), lambda i, k: (i, 0)),
            pl.BlockSpec((1, tk), lambda i, k: (0, k)),
            pl.BlockSpec((tq, tk), lambda i, k: (i, k)),
            pl.BlockSpec((tk, c), lambda i, k: (k, 0)),
        ],
        out_specs=pl.BlockSpec((tq, c), lambda i, k: (i, 0)),
        scratch_shapes=[
            pltpu.VMEM((tq, 1), jnp.float32),
            pltpu.VMEM((tq, 1), jnp.float32),
            pltpu.VMEM((tq, c), jnp.float32),
        ],
        compiler_params=pltpu.CompilerParams(
            dimension_semantics=("parallel", "arbitrary"),
            vmem_limit_bytes=vmem_limit),
        cost_estimate=pl.CostEstimate(
            flops=int(2 * n * n * c + 10 * n * n),
            transcendentals=int(n * n),
            bytes_accessed=int(n * n + 4 * (2 * n * c + 2 * n))),
    )(s1o, s2o, adj_i8, wh2)


# --------------------------------------------------------------------------
# Wrapper
# --------------------------------------------------------------------------
def gat_forward(x, adj, W, A, W_out, A_out, *, alpha):
    """Full GAT forward (eval mode). Returns log-probabilities (N, nclass)."""
    H, F_in, F_hid = W.shape
    N = x.shape[0]
    HF = H * F_hid
    C = W_out.shape[1]
    tq = _row_tile(N)
    tk = _key_tile(N)
    vmem_limit = _vmem_limit_bytes()

    # ---- one-time wrapper-side prep (tiny) ----
    # int8 adjacency: mask compare happens in-kernel; no (N,N) f32 bias in HBM.
    adj_i8 = (adj > 0).astype(jnp.int8)
    # concatenated projection weights: x @ W_flat has head h at columns h*F_hid:
    W_flat = jnp.transpose(W, (1, 0, 2)).reshape(F_in, HF)
    # fold the attention-score projector into the same matmul:
    # S_w[:, h]   = W_h @ a_h[:, 0]   (query-side score weights)
    # S_w[:, H+h] = W_h @ a_h[:, 1]   (key-side score weights)
    S_w = jnp.einsum('hik,hkc->ich', W, A).reshape(F_in, 2 * H)
    W_cat1 = jnp.concatenate([W_flat, S_w], axis=1)          # (F_in, HF + 2H)

    # ---- layer 1: one wide projection + key-tiled multi-head attention ----
    proj1 = _proj_call(x, W_cat1, tq, vmem_limit)             # (N, HF + 2H)
    wh_all = proj1[:, :HF]                                    # (N, HF)
    s1 = proj1[:, HF:HF + H]                                  # (N, H) query scores
    s2t = jnp.transpose(proj1[:, HF + H:])                    # (H, N) key scores
    x2 = _attn_heads_call(s1, s2t, adj_i8, wh_all, alpha=alpha,
                          f_hid=F_hid, tq=tq, tk=tk,
                          vmem_limit=vmem_limit)              # (N, HF), concat layout

    # ---- layer 2: output attention + elu + log_softmax ----
    W_cat2 = jnp.concatenate([W_out, W_out @ A_out], axis=1)  # (HF, C + 2)
    proj2 = _proj_call(x2, W_cat2, tq, vmem_limit)            # (N, C + 2)
    wh2 = proj2[:, :C]
    s1o = proj2[:, C:C + 1]                                   # (N, 1)
    s2o = jnp.transpose(proj2[:, C + 1:C + 2])                # (1, N)
    return _attn_out_call(s1o, s2o, adj_i8, wh2, alpha=alpha,
                          tq=tq, tk=tk, vmem_limit=vmem_limit)


def gat_reference(x, adj, W, A, W_out, A_out, *, alpha):
    """Pure-JAX reference of the same forward pass (eval mode, PyTorch order)."""
    def layer(h_in, w, a, concat):
        wh = h_in @ w
        e12 = wh @ a
        e = e12[:, 0:1] + e12[:, 1:2].T
        e = jnp.where(e > 0, e, alpha * e)
        e = jnp.where(adj > 0, e, NEG_BIG)
        att = jax.nn.softmax(e, axis=1)
        hp = att @ wh
        return jax.nn.elu(hp) if concat else hp

    heads = [layer(x, W[h], A[h], True) for h in range(W.shape[0])]
    x2 = jnp.concatenate(heads, axis=1)
    out = jax.nn.elu(layer(x2, W_out, A_out, False))
    return jax.nn.log_softmax(out, axis=1)


if __name__ == "__main__":
    # Small, deterministic problem: N nodes, nfeat -> nheads*nhid -> nclass
    N, nfeat, nhid, nclass, nheads = 256, 64, 16, 8, 4
    alpha = 0.2  # LeakyReLU negative slope

    key = jax.random.PRNGKey(0)
    k_x, k_adj, k_W, k_A, k_Wo, k_Ao = jax.random.split(key, 6)

    x = jax.random.normal(k_x, (N, nfeat), dtype=jnp.float32)

    # random symmetric adjacency with self-loops
    raw = (jax.random.uniform(k_adj, (N, N)) < 0.1).astype(jnp.float32)
    adj = jnp.maximum(jnp.maximum(raw, raw.T), jnp.eye(N, dtype=jnp.float32))

    # deterministic parameter init (stand-in for xavier_uniform)
    W = jax.random.normal(k_W, (nheads, nfeat, nhid), dtype=jnp.float32) / jnp.sqrt(nfeat)
    A = jax.random.normal(k_A, (nheads, nhid, 2), dtype=jnp.float32) / jnp.sqrt(nhid)
    W_out = jax.random.normal(k_Wo, (nheads * nhid, nclass), dtype=jnp.float32) / jnp.sqrt(nheads * nhid)
    A_out = jax.random.normal(k_Ao, (nclass, 2), dtype=jnp.float32) / jnp.sqrt(nclass)

    out = gat_forward(x, adj, W, A, W_out, A_out, alpha=alpha)
    out = jax.block_until_ready(out)

    ref = gat_reference(x, adj, W, A, W_out, A_out, alpha=alpha)
    assert out.shape == (N, nclass)
    assert jnp.allclose(out, ref, atol=1e-4, rtol=1e-4), (
        f"max abs err = {jnp.max(jnp.abs(out - ref))}")

    print("KERNEL_OK")
</pallas_src>

<mosaic_0001>
module attributes {stable_mosaic.version = 11 : i64} {
  func.func @_proj_kernel(%arg0: i32, %arg1: memref<128x64xf32, #tpu.memory_space<vmem>>, %arg2: memref<64x72xf32, #tpu.memory_space<vmem>>, %arg3: memref<128x72xf32, #tpu.memory_space<vmem>>) attributes {dimension_semantics = [#tpu.dimension_semantics<parallel>], iteration_bounds = array<i64: 2>, scalar_prefetch = 0 : i64, scratch_operands = 0 : i64, tpu.core_type = #tpu.core_type<tc>, window_params = [{transform_indices = @transform_0, window_bounds = array<i64: 128, 64>}, {pipeline_mode = #tpu.pipeline_mode<synchronous>, transform_indices = @transform_1, window_bounds = array<i64: 64, 72>}, {transform_indices = @transform_2, window_bounds = array<i64: 128, 72>}]} {
    %c0 = arith.constant 0 : index
    %c0_0 = arith.constant 0 : index
    %0 = vector.load %arg1[%c0, %c0_0] : memref<128x64xf32, #tpu.memory_space<vmem>>, vector<128x64xf32>
    %c0_1 = arith.constant 0 : index
    %c0_2 = arith.constant 0 : index
    %1 = vector.load %arg2[%c0_1, %c0_2] : memref<64x72xf32, #tpu.memory_space<vmem>>, vector<64x72xf32>
    %cst = arith.constant dense<0.000000e+00> : vector<128x72xf32>
    %2 = tpu.matmul %0, %1, %cst {dimension_numbers = #tpu.dot_dimension_numbers<[1], [0], [0], [1], [0, 0, 1, 1], [], []>} : vector<128x64xf32>, vector<64x72xf32>, vector<128x72xf32> -> vector<128x72xf32>
    %c0_3 = arith.constant 0 : index
    %c0_4 = arith.constant 0 : index
    %3 = vector.load %arg3[%c0_3, %c0_4] : memref<128x72xf32, #tpu.memory_space<vmem>>, vector<128x72xf32>
    tpu.vector_store %arg3[%c0_3, %c0_4], %2 {strides = array<i32>} : memref<128x72xf32, #tpu.memory_space<vmem>>, vector<128x72xf32>,
    return
  }
  func.func @transform_0(%arg0: i32) -> (i32, i32) {
    %c0_i32 = arith.constant 0 : i32
    %c0_i32_0 = arith.constant 0 : i32
    return %arg0, %c0_i32 : i32, i32
  }
  func.func @transform_1(%arg0: i32) -> (i32, i32) {
    %c0_i32 = arith.constant 0 : i32
    %c0_i32_0 = arith.constant 0 : i32
    %c0_i32_1 = arith.constant 0 : i32
    return %c0_i32, %c0_i32_0 : i32, i32
  }
  func.func @transform_2(%arg0: i32) -> (i32, i32) {
    %c0_i32 = arith.constant 0 : i32
    %c0_i32_0 = arith.constant 0 : i32
    return %arg0, %c0_i32 : i32, i32
  }
}

</mosaic_0001>

<llo_original>
// kernel: tpu_custom_call.1
$region0: #{tpu_custom_call.1}
  #allocation0 [shape = 'u32[]', space=smem, size = 0x4, offset = 0x4, fixed_abs, tag = 'smem constant byte address 0x4 - core index']
  #allocation1 [shape = 'u32[144,128]{1,0:T(1,128)}', space=vmem, size = 0x12000, scoped, tag = 'internal scratch']
  %s0 = inlined_call_operand.vmem [shape: f32[256,64], index: 0, kind: input, shape index: {}]
  %s1 = inlined_call_operand.vmem [shape: f32[64,72], index: 1, kind: input, shape index: {}]
  %s2 = inlined_call_operand.vmem [shape: f32[256,72], index: 2, kind: output, shape index: {}]
  %s3 = sld [smem:[#allocation0]]
  $region41: #{tpu_custom_call.1} parent=0
    _
  %s5 = ssub.s32 1, %s3
  %s6 = scalar_select 0, %s5, %s3
  loop: start=0, step=1, limit=4
  $region2: #{tpu_custom_call.1} parent=0 // loop_pre_header
    _
  $region3: #{tpu_custom_call.1} parent=0 // loop_header
    %s8 = sphi 0, %s12
    %p9 = scmp.ge.s32.totalorder %s8, 4
    %s18 = sphi 0, %s20
    %s21 = sphi 0, %s18
    %s22 = sphi 0, %s21
    %s38 = sphi 0, %s22
    %s42 = sphi 0, %s42
    %s44 = sphi 0, %s42
    %s45 = sphi 0, %s44
    %s59 = sphi 0, %s45
    %s65 = sphi 0, %s67
    %s68 = sphi 0, %s65
    %s69 = sphi 0, %s68
    %s85 = sphi 0, %s69
  $region4: #{tpu_custom_call.1} parent=0 // loop_header_branch
    %11 = sbr.rel (%p9) target = $region8
  $region5: #{tpu_custom_call.1} parent=0 // loop_body
    %s13 = ssub.s32 %s8, 1
    %s14 = ssub.s32 %s8, 2
    %s15 = sadd.s32 %s8, 1
    %s16 = ssub.s32 %s8, %s15
    %p17 = scmp.eq.s32.totalorder %s16, 0
    %s19 = sadd.s32 %s18, 1
    %s20 = scalar_select %p17, %s18, %s19
    %p23 = pneg %p17
    %p24 = scmp.eq.s32.totalorder %s8, 1
    %p25 = por %p23, %p24
    %p26 = scmp.ne.s32.totalorder %s18, %s21
    %p27 = scmp.eq.s32.totalorder %s8, 0
    %p28 = por %p26, %p27
    %p29 = scmp.ne.s32.totalorder %s18, %s21
    %p30 = scmp.eq.s32.totalorder %s13, 1
    %p31 = por %p29, %p30
    %p32 = scmp.ne.s32.totalorder %s21, %s22
    %p33 = scmp.eq.s32.totalorder %s13, 0
    %p34 = por %p32, %p33
    %p35 = scmp.ne.s32.totalorder %s21, %s22
    %p36 = scmp.eq.s32.totalorder %s14, 1
    %p37 = por %p35, %p36
    %p39 = scmp.ne.s32.totalorder %s22, %s38
    %p40 = scmp.eq.s32.totalorder %s14, 0
    %p41 = por %p39, %p40
    %s43 = sadd.s32 %s42, 1
    %p46 = scmp.eq.s32.totalorder %s8, 1
    %p47 = scmp.ne.s32.totalorder %s42, %s44
    %p48 = scmp.eq.s32.totalorder %s8, 0
    %p49 = por %p47, %p48
    %p50 = scmp.ne.s32.totalorder %s42, %s44
    %p51 = scmp.eq.s32.totalorder %s13, 1
    %p52 = por %p50, %p51
    %p53 = scmp.ne.s32.totalorder %s44, %s45
    %p54 = scmp.eq.s32.totalorder %s13, 0
    %p55 = por %p53, %p54
    %p56 = scmp.ne.s32.totalorder %s44, %s45
    %p57 = scmp.eq.s32.totalorder %s14, 1
    %p58 = por %p56, %p57
    %p60 = scmp.ne.s32.totalorder %s45, %s59
    %p61 = scmp.eq.s32.totalorder %s14, 0
    %p62 = por %p60, %p61
    %s63 = ssub.s32 %s8, %s15
    %p64 = scmp.eq.s32.totalorder %s63, 0
    %s66 = sadd.s32 %s65, 1
    %s67 = scalar_select %p64, %s65, %s66
    %p70 = pneg %p64
    %p71 = scmp.eq.s32.totalorder %s8, 1
    %p72 = por %p70, %p71
    %p73 = scmp.ne.s32.totalorder %s65, %s68
    %p74 = scmp.eq.s32.totalorder %s8, 0
    %p75 = por %p73, %p74
    %p76 = scmp.ne.s32.totalorder %s65, %s68
    %p77 = scmp.eq.s32.totalorder %s13, 1
    %p78 = por %p76, %p77
    %p79 = scmp.ne.s32.totalorder %s68, %s69
    %p80 = scmp.eq.s32.totalorder %s13, 0
    %p81 = por %p79, %p80
    %p82 = scmp.ne.s32.totalorder %s68, %s69
    %p83 = scmp.eq.s32.totalorder %s14, 1
    %p84 = por %p82, %p83
    %p86 = scmp.ne.s32.totalorder %s69, %s85
    %p87 = scmp.eq.s32.totalorder %s14, 0
    %p88 = por %p86, %p87
    %p89 = scmp.le.s32.totalorder 1, %s8
    %p90 = scmp.lt.s32.totalorder %s8, 3
    %p91 = pnand %p89, %p90
    %p92 = pneg %p91
    // Predicated region
    $region9: #{tpu_custom_call.1} parent=5 // pred_check
      _
    $region10: #{tpu_custom_call.1} parent=5 // pred_check_branch
      %94 = sbr.rel (%p91) target = $region12
    $region11: #{tpu_custom_call.1} parent=5 // pred_region
      %s95 = ssub.s32 %s8, 1
      // Predicated region
      $region13: #{tpu_custom_call.1} parent=11 // pred_check
        %p96 = pneg %p55
      $region14: #{tpu_custom_call.1} parent=11 // pred_check_branch
        %98 = sbr.rel (%p96) target = $region16
      $region15: #{tpu_custom_call.1} parent=11 // pred_region
        _
      $region16: #{tpu_custom_call.1} parent=11 // pred_fallthru
        _
    $region12: #{tpu_custom_call.1} parent=5 // pred_fallthru
      _
    %p99 = scmp.lt.s32.totalorder %s8, 2
    // Predicated region
    $region17: #{tpu_custom_call.1} parent=5 // pred_check
      %p100 = pneg %p99
    $region18: #{tpu_custom_call.1} parent=5 // pred_check_branch
      %102 = sbr.rel (%p100) target = $region20
    $region19: #{tpu_custom_call.1} parent=5 // pred_region
      // Predicated region
      $region21: #{tpu_custom_call.1} parent=19 // pred_check
        %p103 = pneg %p28
      $region22: #{tpu_custom_call.1} parent=19 // pred_check_branch
        %105 = sbr.rel (%p103) target = $region24
      $region23: #{tpu_custom_call.1} parent=19 // pred_region
        %s106 = smul.u32 16, %s8
        %p107 = scmp.lt.s32.totalorder %s106, 31
        %s108 = scalar_select %p107, %s106, 31
        %s109 = smul.addr %s108, 8
        %s110 = scalar_lea.vmem %s0, %s109
        %s111 = smul.u32 16, %s8
      $region24: #{tpu_custom_call.1} parent=19 // pred_fallthru
        _
    $region20: #{tpu_custom_call.1} parent=5 // pred_fallthru
      _
    %p112 = scmp.le.s32.totalorder 1, %s8
    %p113 = scmp.lt.s32.totalorder %s8, 3
    %p114 = pnand %p112, %p113
    %p115 = pneg %p114
    // Predicated region
    $region25: #{tpu_custom_call.1} parent=5 // pred_check
      _
    $region26: #{tpu_custom_call.1} parent=5 // pred_check_branch
      %117 = sbr.rel (%p114) target = $region28
    $region27: #{tpu_custom_call.1} parent=5 // pred_region
      %s118 = ssub.s32 %s8, 1
      %s119 = smul.u32 16, %s13
      %p120 = scmp.lt.s32.totalorder %s119, 31
      %s121 = scalar_select %p120, %s119, 31
      %s122 = smul.addr %s121, 8
      %s123 = scalar_lea.vmem %s0, %s122
      %p124 = pneg %p34
      %p125 = pneg %p31
      %p126 = pneg %p55
      %p127 = pneg %p52
      %p128 = pneg %p81
      %p129 = pneg %p78
      %s130 = smul.u32 16, %s13
      %p131 = scmp.lt.s32.totalorder %s130, 31
      %s132 = scalar_select %p131, %s130, 31
      %s133 = smul.addr %s132, 8
      %s134 = scalar_lea.vmem %s2, %s133
      %s135 = smul.u32 16, %s13
      %p136 = scmp.lt.s32.totalorder %s135, 31
      %s137 = scalar_select %p136, %s135, 31
      %s138 = smul.addr %s137, 8
      %s139 = scalar_lea.vmem %s0, %s138
      %s140 = smul.u32 16, %s13
      %s141 = smul.u32 16, %s13
      %p142 = scmp.lt.s32.totalorder %s141, 31
      %s143 = scalar_select %p142, %s141, 31
      %s144 = smul.addr %s143, 8
      %s145 = scalar_lea.vmem %s2, %s144
      %s146 = smul.u32 16, %s13
      %v147 = vld [vmem:[%s139] sm:$0xff]
      %v148 = vld [vmem:[%s139 + $0x8] sm:$0xff]
      %v149 = vld [vmem:[%s139 + $0x10] sm:$0xff]
      %v150 = vld [vmem:[%s139 + $0x18] sm:$0xff]
      %v151 = vld [vmem:[%s139 + $0x20] sm:$0xff]
      %v152 = vld [vmem:[%s139 + $0x28] sm:$0xff]
      %v153 = vld [vmem:[%s139 + $0x30] sm:$0xff]
      %v154 = vld [vmem:[%s139 + $0x38] sm:$0xff]
      %v155 = vld [vmem:[%s139 + $0x40] sm:$0xff]
      %v156 = vld [vmem:[%s139 + $0x48] sm:$0xff]
      %v157 = vld [vmem:[%s139 + $0x50] sm:$0xff]
      %v158 = vld [vmem:[%s139 + $0x58] sm:$0xff]
      %v159 = vld [vmem:[%s139 + $0x60] sm:$0xff]
      %v160 = vld [vmem:[%s139 + $0x68] sm:$0xff]
      %v161 = vld [vmem:[%s139 + $0x70] sm:$0xff]
      %v162 = vld [vmem:[%s139 + $0x78] sm:$0xff]
      %v163 = vld [vmem:[%s1] sm:$0xff]
      %v164 = vld [vmem:[%s1 + $0x8] sm:$0xff]
      %v165 = vld [vmem:[%s1 + $0x10] sm:$0xff]
      %v166 = vld [vmem:[%s1 + $0x18] sm:$0xff]
      %v167 = vld [vmem:[%s1 + $0x20] sm:$0xff]
      %v168 = vld [vmem:[%s1 + $0x28] sm:$0xff]
      %v169 = vld [vmem:[%s1 + $0x30] sm:$0xff]
      %v170 = vld [vmem:[%s1 + $0x38] sm:$0xff]
      %vm171 = vcmask 523264
      %v173 = vsel %vm171, %v147, 0
      %v176 = vsel %vm171, %v148, 0
      %v179 = vsel %vm171, %v149, 0
      %v182 = vsel %vm171, %v150, 0
      %v185 = vsel %vm171, %v151, 0
      %v188 = vsel %vm171, %v152, 0
      %v191 = vsel %vm171, %v153, 0
      %v194 = vsel %vm171, %v154, 0
      %v197 = vsel %vm171, %v155, 0
      %v200 = vsel %vm171, %v156, 0
      %v203 = vsel %vm171, %v157, 0
      %v206 = vsel %vm171, %v158, 0
      %v209 = vsel %vm171, %v159, 0
      %v212 = vsel %vm171, %v160, 0
      %v215 = vsel %vm171, %v161, 0
      %v218 = vsel %vm171, %v162, 0
      %220 = vmatprep.subr.mxu0 0.0
      %221 = vmatpush1.msra.mxu0 0.0
      %222 = vmatprep.subr.mxu0 0.0
      %223 = vmatpush1.msra.mxu0 0.0
      %224 = vmatprep.subr.mxu0 0.0
      %225 = vmatpush1.msra.mxu0 0.0
      %226 = vmatprep.subr.mxu0 0.0
      %227 = vmatpush1.msra.mxu0 0.0
      %228 = vmatprep.subr.mxu0 0.0
      %229 = vmatpush1.msra.mxu0 0.0
      %230 = vmatprep.subr.mxu0 0.0
      %231 = vmatpush1.msra.mxu0 0.0
      %232 = vmatprep.subr.mxu0 0.0
      %233 = vmatpush1.msra.mxu0 0.0
      %234 = vmatprep.subr.mxu0 0.0
      %235 = vmatpush1.msra.mxu0 0.0
      %236 = vmatprep.subr.mxu0 0.0
      %237 = vmatpush1.msra.mxu0 %v170
      %238 = vmatprep.subr.mxu0 0.0
      %239 = vmatpush1.msra.mxu0 %v169
      %240 = vmatprep.subr.mxu0 0.0
      %241 = vmatpush1.msra.mxu0 %v168
      %242 = vmatprep.subr.mxu0 0.0
      %243 = vmatpush1.msra.mxu0 %v167
      %244 = vmatprep.subr.mxu0 0.0
      %245 = vmatpush1.msra.mxu0 %v166
      %246 = vmatprep.subr.mxu0 0.0
      %247 = vmatpush1.msra.mxu0 %v165
      %248 = vmatprep.subr.mxu0 0.0
      %249 = vmatpush1.msra.mxu0 %v164
      %250 = vmatprep.subr.mxu0 0.0
      %251 = vmatpush1.msra.mxu0 %v163
      %252 = vmatprep.subr.mxu0 0.0
      %253 = vmatpush2.msra.mxu0 0.0
      %254 = vmatprep.subr.mxu0 0.0
      %255 = vmatpush2.msra.mxu0 0.0
      %256 = vmatprep.subr.mxu0 0.0
      %257 = vmatpush2.msra.mxu0 0.0
      %258 = vmatprep.subr.mxu0 0.0
      %259 = vmatpush2.msra.mxu0 0.0
      %260 = vmatprep.subr.mxu0 0.0
      %261 = vmatpush2.msra.mxu0 0.0
      %262 = vmatprep.subr.mxu0 0.0
      %263 = vmatpush2.msra.mxu0 0.0
      %264 = vmatprep.subr.mxu0 0.0
      %265 = vmatpush2.msra.mxu0 0.0
      %266 = vmatprep.subr.mxu0 0.0
      %267 = vmatpush2.msra.mxu0 0.0
      %268 = vmatprep.subr.mxu0 0.0
      %269 = vmatpush2.msra.mxu0 0.0
      %270 = vmatprep.subr.mxu0 0.0
      %271 = vmatpush2.msra.mxu0 0.0
      %272 = vmatprep.subr.mxu0 0.0
      %273 = vmatpush2.msra.mxu0 0.0
      %274 = vmatprep.subr.mxu0 0.0
      %275 = vmatpush2.msra.mxu0 0.0
      %276 = vmatprep.subr.mxu0 0.0
      %277 = vmatpush2.msra.mxu0 0.0
      %278 = vmatprep.subr.mxu0 0.0
      %279 = vmatpush2.msra.mxu0 0.0
      %280 = vmatprep.subr.mxu0 0.0
      %281 = vmatpush2.msra.mxu0 0.0
      %282 = vmatprep.subr.mxu0 0.0
      %283 = vmatpush2.msra.mxu0 0.0
      %284 = vmatprep.mubr.f32.mxu0 0.0
      %285 = vmatmul.mubr.f32.gmra.mxu0 %v173
      %v286 = vpop.f32.mrf.mxu0
      %v287 = vadd.f32 0.0, %v286
      %v288 = vpop.f32.mrf.mxu0
      %289 = vmatprep.mubr.f32.mxu0 0.0
      %290 = vmatmul.mubr.f32.gmra.mxu0 %v176
      %v291 = vpop.f32.mrf.mxu0
      %v292 = vadd.f32 0.0, %v291
      %v293 = vpop.f32.mrf.mxu0
      %294 = vmatprep.mubr.f32.mxu0 0.0
      %295 = vmatmul.mubr.f32.gmra.mxu0 %v179
      %v296 = vpop.f32.mrf.mxu0
      %v297 = vadd.f32 0.0, %v296
      %v298 = vpop.f32.mrf.mxu0
      %299 = vmatprep.mubr.f32.mxu0 0.0
      %300 = vmatmul.mubr.f32.gmra.mxu0 %v182
      %v301 = vpop.f32.mrf.mxu0
      %v302 = vadd.f32 0.0, %v301
      %v303 = vpop.f32.mrf.mxu0
      %304 = vmatprep.mubr.f32.mxu0 0.0
      %305 = vmatmul.mubr.f32.gmra.mxu0 %v185
      %v306 = vpop.f32.mrf.mxu0
      %v307 = vadd.f32 0.0, %v306
      %v308 = vpop.f32.mrf.mxu0
      %309 = vmatprep.mubr.f32.mxu0 0.0
      %310 = vmatmul.mubr.f32.gmra.mxu0 %v188
      %v311 = vpop.f32.mrf.mxu0
      %v312 = vadd.f32 0.0, %v311
      %v313 = vpop.f32.mrf.mxu0
      %314 = vmatprep.mubr.f32.mxu0 0.0
      %315 = vmatmul.mubr.f32.gmra.mxu0 %v191
      %v316 = vpop.f32.mrf.mxu0
      %v317 = vadd.f32 0.0, %v316
      %v318 = vpop.f32.mrf.mxu0
      %319 = vmatprep.mubr.f32.mxu0 0.0
      %320 = vmatmul.mubr.f32.gmra.mxu0 %v194
      %v321 = vpop.f32.mrf.mxu0
      %v322 = vadd.f32 0.0, %v321
      %v323 = vpop.f32.mrf.mxu0
      %324 = vmatprep.mubr.f32.mxu0 0.0
      %325 = vmatmul.mubr.f32.gmra.mxu0 %v197
      %v326 = vpop.f32.mrf.mxu0
      %v327 = vadd.f32 0.0, %v326
      %v328 = vpop.f32.mrf.mxu0
      %329 = vmatprep.mubr.f32.mxu0 0.0
      %330 = vmatmul.mubr.f32.gmra.mxu0 %v200
      %v331 = vpop.f32.mrf.mxu0
      %v332 = vadd.f32 0.0, %v331
      %v333 = vpop.f32.mrf.mxu0
      %334 = vmatprep.mubr.f32.mxu0 0.0
      %335 = vmatmul.mubr.f32.gmra.mxu0 %v203
      %v336 = vpop.f32.mrf.mxu0
      %v337 = vadd.f32 0.0, %v336
      %v338 = vpop.f32.mrf.mxu0
      %339 = vmatprep.mubr.f32.mxu0 0.0
      %340 = vmatmul.mubr.f32.gmra.mxu0 %v206
      %v341 = vpop.f32.mrf.mxu0
      %v342 = vadd.f32 0.0, %v341
      %v343 = vpop.f32.mrf.mxu0
      %344 = vmatprep.mubr.f32.mxu0 0.0
      %345 = vmatmul.mubr.f32.gmra.mxu0 %v209
      %v346 = vpop.f32.mrf.mxu0
      %v347 = vadd.f32 0.0, %v346
      %v348 = vpop.f32.mrf.mxu0
      %349 = vmatprep.mubr.f32.mxu0 0.0
      %350 = vmatmul.mubr.f32.gmra.mxu0 %v212
      %v351 = vpop.f32.mrf.mxu0
      %v352 = vadd.f32 0.0, %v351
      %v353 = vpop.f32.mrf.mxu0
      %354 = vmatprep.mubr.f32.mxu0 0.0
      %355 = vmatmul.mubr.f32.gmra.mxu0 %v215
      %v356 = vpop.f32.mrf.mxu0
      %v357 = vadd.f32 0.0, %v356
      %v358 = vpop.f32.mrf.mxu0
      %359 = vmatprep.mubr.f32.mxu0 0.0
      %360 = vmatmul.mubr.f32.gmra.mxu0 %v218
      %v361 = vpop.f32.mrf.mxu0
      %v362 = vadd.f32 0.0, %v361
      %v363 = vpop.f32.mrf.mxu0
      %364 = vdwg.mxu0
      %vm365 = vcmask 588800
      %366 = vst.msk [vmem:[%s145] sm:$0xff] %vm365, %v287
      %367 = vst.msk [vmem:[%s145 + $0x8] sm:$0xff] %vm365, %v292
      %368 = vst.msk [vmem:[%s145 + $0x10] sm:$0xff] %vm365, %v297
      %369 = vst.msk [vmem:[%s145 + $0x18] sm:$0xff] %vm365, %v302
      %370 = vst.msk [vmem:[%s145 + $0x20] sm:$0xff] %vm365, %v307
      %371 = vst.msk [vmem:[%s145 + $0x28] sm:$0xff] %vm365, %v312
      %372 = vst.msk [vmem:[%s145 + $0x30] sm:$0xff] %vm365, %v317
      %373 = vst.msk [vmem:[%s145 + $0x38] sm:$0xff] %vm365, %v322
      %374 = vst.msk [vmem:[%s145 + $0x40] sm:$0xff] %vm365, %v327
      %375 = vst.msk [vmem:[%s145 + $0x48] sm:$0xff] %vm365, %v332
      %376 = vst.msk [vmem:[%s145 + $0x50] sm:$0xff] %vm365, %v337
      %377 = vst.msk [vmem:[%s145 + $0x58] sm:$0xff] %vm365, %v342
      %378 = vst.msk [vmem:[%s145 + $0x60] sm:$0xff] %vm365, %v347
      %379 = vst.msk [vmem:[%s145 + $0x68] sm:$0xff] %vm365, %v352
      %380 = vst.msk [vmem:[%s145 + $0x70] sm:$0xff] %vm365, %v357
      %381 = vst.msk [vmem:[%s145 + $0x78] sm:$0xff] %vm365, %v362
      %s382 = smul.u32 16, %s13
      %p383 = scmp.lt.s32.totalorder %s382, 31
      %s384 = scalar_select %p383, %s382, 31
      %s385 = smul.addr %s384, 8
      %s386 = scalar_lea.vmem %s2, %s385
      // Predicated region
      $region29: #{tpu_custom_call.1} parent=27 // pred_check
        %p387 = pneg %p78
      $region30: #{tpu_custom_call.1} parent=27 // pred_check_branch
        %389 = sbr.rel (%p387) target = $region32
      $region31: #{tpu_custom_call.1} parent=27 // pred_region
        %s390 = smul.u32 16, %s13
      $region32: #{tpu_custom_call.1} parent=27 // pred_fallthru
        _
    $region28: #{tpu_custom_call.1} parent=5 // pred_fallthru
      _
    %p391 = scmp.le.s32.totalorder 2, %s8
    // Predicated region
    $region33: #{tpu_custom_call.1} parent=5 // pred_check
      %p392 = pneg %p391
    $region34: #{tpu_custom_call.1} parent=5 // pred_check_branch
      %394 = sbr.rel (%p392) target = $region36
    $region35: #{tpu_custom_call.1} parent=5 // pred_region
      %s395 = ssub.s32 %s8, 2
      // Predicated region
      $region37: #{tpu_custom_call.1} parent=35 // pred_check
        %p396 = pneg %p84
      $region38: #{tpu_custom_call.1} parent=35 // pred_check_branch
        %398 = sbr.rel (%p396) target = $region40
      $region39: #{tpu_custom_call.1} parent=35 // pred_region
        %s399 = smul.u32 16, %s14
        %p400 = scmp.lt.s32.totalorder %s399, 31
        %s401 = scalar_select %p400, %s399, 31
        %s402 = smul.addr %s401, 8
        %s403 = scalar_lea.vmem %s2, %s402
      $region40: #{tpu_custom_call.1} parent=35 // pred_fallthru
        _
    $region36: #{tpu_custom_call.1} parent=5 // pred_fallthru
      _
  $region6: #{tpu_custom_call.1} parent=0 // loop_footer
    %s12 = sadd.s32 1, %s8
  $region7: #{tpu_custom_call.1} parent=0 // loop_footer_branch
    %7 = sbr.rel target = $region3
  $region8: #{tpu_custom_call.1} parent=0 // loop_exit
    _

</llo_original>
